<compile_context>
chip_gen: v6e
topology: v6e:2x2x1
jax: 0.10.0
libtpu: 0.0.40
codegen_flags: <defaults>
</compile_context>

<pallas_src>
import numpy as np
import jax
import jax.numpy as jnp
from jax.experimental import pallas as pl
from jax.experimental.pallas import tpu as pltpu


def _round_up(x: int, m: int) -> int:
    return (x + m - 1) // m * m


def _pick_tb(batch: int, cap: int) -> int:
    """Rows gathered per grid step: multiple of 8, <= padded batch, and (when the
    batch allows) small enough to leave >= 2 grid blocks for v7x megacore."""
    b8 = _round_up(max(batch, 1), 8)
    tb = min(_round_up(max(cap, 8), 8), b8)
    half = _round_up(max(b8 // 2, 8), 8)
    if b8 >= 16 and tb > half:
        tb = half
    return max(tb, 8)


# --------------------------------------------------------------------------- #
# Primary path: VMEM-resident table, on-chip gather.                           #
# --------------------------------------------------------------------------- #
def _make_resident_kernel(tb: int):
    """idx_ref : (B_pad,) int32 flat row indices in SMEM (scalar prefetch)
       w_ref   : (N2, num_rels_pad) full table, VMEM-resident (constant block)
       out_ref : (tb, num_rels_pad) VMEM output block for this row-block."""

    def kernel(idx_ref, w_ref, out_ref):
        base = pl.program_id(0) * tb

        @pl.loop(0, tb)
        def _(r):
            row = idx_ref[base + r]
            out_ref[pl.ds(r, 1), :] = w_ref[pl.ds(row, 1), :]

    return kernel


# --------------------------------------------------------------------------- #
# Fallback path (table too large for VMEM): per-row HBM DMAs into the output.  #
# --------------------------------------------------------------------------- #
def _make_hbm_gather_kernel(tb: int):
    """idx_ref : (B_pad,) int32 flat row indices in SMEM
       w_hbm   : (N2, num_rels_pad) table left in HBM (pl.ANY)
       out_ref : (tb, num_rels_pad) VMEM output block
       sem     : (tb,) DMA semaphores — tb row copies kept in flight."""

    def kernel(idx_ref, w_hbm, out_ref, sem):
        base = pl.program_id(0) * tb
        copies = []
        for r in range(tb):  # static unroll, tb is small on this path
            row = idx_ref[base + r]
            cp = pltpu.make_async_copy(w_hbm.at[row], out_ref.at[r], sem.at[r])
            cp.start()
            copies.append(cp)
        for cp in copies:
            cp.wait()

    return kernel


def frequency_bias_forward(labels: jax.Array, obj_baseline_weight: jax.Array,
                           *, rows_per_step: int = 256,
                           resident_vmem_budget_bytes: int = 48 << 20,
                           force_hbm_fallback: bool = False) -> jax.Array:
    """JAX/Pallas equivalent of FrequencyBias.forward(labels).

    labels              : (B, 2) integer object labels, values in [0, num_objs)
    obj_baseline_weight : (num_objs * num_objs, num_rels) float table
    Returns             : (B, num_rels), dtype == obj_baseline_weight.dtype
    """
    assert labels.ndim == 2 and labels.shape[1] == 2, "labels must be [batch, 2]"
    B = labels.shape[0]
    N2, num_rels = obj_baseline_weight.shape
    num_objs = int(round(np.sqrt(N2)))
    assert num_objs * num_objs == N2, "weight rows must be num_objs**2"

    # Lane-dense columns: pad num_rels up to a multiple of 128.
    num_rels_pad = _round_up(num_rels, 128)
    w = obj_baseline_weight
    if num_rels_pad != num_rels:
        w = jnp.pad(w, ((0, 0), (0, num_rels_pad - num_rels)))

    itemsize = jnp.dtype(w.dtype).itemsize
    table_bytes = N2 * num_rels_pad * itemsize

    # Precompute + clamp the flat row index wrapper-side (1-D int32 -> tiny SMEM).
    flat = (labels[:, 0].astype(jnp.int32) * jnp.int32(num_objs)
            + labels[:, 1].astype(jnp.int32))
    flat = jnp.clip(flat, 0, N2 - 1)

    # --- choose path & block size -------------------------------------------
    tb = _pick_tb(B, rows_per_step)
    out_block_bytes = tb * num_rels_pad * itemsize
    resident_need = 2 * table_bytes + 4 * out_block_bytes + (2 << 20)
    use_resident = (not force_hbm_fallback) and (resident_need <= resident_vmem_budget_bytes)

    if not use_resident:
        # DMA-per-row fallback: keep the in-flight copy count modest.
        tb = _pick_tb(B, min(rows_per_step, 32))
        out_block_bytes = tb * num_rels_pad * itemsize

    b_pad = _round_up(B, tb)
    if b_pad != B:
        flat = jnp.pad(flat, (0, b_pad - B))  # padded rows gather row 0, sliced off

    if use_resident:
        kernel = _make_resident_kernel(tb)
        out = pl.pallas_call(
            kernel,
            out_shape=jax.ShapeDtypeStruct((b_pad, num_rels_pad), w.dtype),
            grid_spec=pltpu.PrefetchScalarGridSpec(
                num_scalar_prefetch=1,                     # flat idx -> SMEM
                grid=(b_pad // tb,),
                in_specs=[pl.BlockSpec((N2, num_rels_pad), lambda i, idx: (0, 0))],
                out_specs=pl.BlockSpec((tb, num_rels_pad), lambda i, idx: (i, 0)),
            ),
            compiler_params=pltpu.CompilerParams(
                dimension_semantics=("parallel",),         # row-blocks independent
                vmem_limit_bytes=int(resident_need),
            ),
        )(flat, w)
    else:
        kernel = _make_hbm_gather_kernel(tb)
        out = pl.pallas_call(
            kernel,
            out_shape=jax.ShapeDtypeStruct((b_pad, num_rels_pad), w.dtype),
            grid_spec=pltpu.PrefetchScalarGridSpec(
                num_scalar_prefetch=1,                     # flat idx -> SMEM
                grid=(b_pad // tb,),
                in_specs=[pl.BlockSpec(memory_space=pl.ANY)],   # table stays in HBM
                out_specs=pl.BlockSpec((tb, num_rels_pad), lambda i, idx: (i, 0)),
                scratch_shapes=[pltpu.SemaphoreType.DMA((tb,))],
            ),
            compiler_params=pltpu.CompilerParams(
                dimension_semantics=("parallel",),
            ),
        )(flat, w)

    return out[:B, :num_rels]


# TODO(synk): index_with_probability (soft pair-probability path, a dense matmul
# against the same table) is not part of forward() and is not implemented here.


if __name__ == "__main__":
    key = jax.random.PRNGKey(0)
    num_objs, num_rels, batch = 16, 51, 24   # num_rels=51 exercises lane padding
    k1, k2 = jax.random.split(key)

    # statistics['pred_dist'] analogue: (num_objs, num_objs, num_rels) float32,
    # flattened into the nn.Embedding weight exactly as in __init__.
    pred_dist = jax.random.uniform(k1, (num_objs, num_objs, num_rels), dtype=jnp.float32)
    obj_baseline = pred_dist.reshape(num_objs * num_objs, num_rels)

    labels = jax.random.randint(k2, (batch, 2), 0, num_objs, dtype=jnp.int32)

    # Pure-JAX reference mirroring the PyTorch forward.
    flat = labels[:, 0] * num_objs + labels[:, 1]
    ref = jax.block_until_ready(obj_baseline[flat])

    # Primary (VMEM-resident) path.
    out = jax.block_until_ready(frequency_bias_forward(labels, obj_baseline))
    assert out.shape == (batch, num_rels) and out.dtype == obj_baseline.dtype
    np.testing.assert_allclose(np.asarray(out), np.asarray(ref), atol=0.0, rtol=0.0)

    # HBM-DMA fallback path (used when the table would not fit VMEM).
    out_fb = jax.block_until_ready(
        frequency_bias_forward(labels, obj_baseline, force_hbm_fallback=True))
    np.testing.assert_allclose(np.asarray(out_fb), np.asarray(ref), atol=0.0, rtol=0.0)

    print("KERNEL_OK")
</pallas_src>

<mosaic_0001>
module attributes {stable_mosaic.version = 11 : i64} {
  func.func @kernel(%arg0: i32, %arg1: memref<32xi32, #tpu.memory_space<smem>>, %arg2: memref<256x128xf32, #tpu.memory_space<vmem>>, %arg3: memref<16x128xf32, #tpu.memory_space<vmem>>) attributes {dimension_semantics = [#tpu.dimension_semantics<parallel>], iteration_bounds = array<i64: 2>, scalar_prefetch = 1 : i64, scratch_operands = 0 : i64, tpu.core_type = #tpu.core_type<tc>, window_params = [{pipeline_mode = #tpu.pipeline_mode<synchronous>, transform_indices = @transform_0, window_bounds = array<i64: 256, 128>}, {transform_indices = @transform_1, window_bounds = array<i64: 16, 128>}]} {
    %c16_i32 = arith.constant 16 : i32
    %0 = arith.muli %arg0, %c16_i32 : i32
    %c0_i32 = arith.constant 0 : i32
    %c16_i32_0 = arith.constant 16 : i32
    %1 = arith.addi %c0_i32, %c16_i32_0 : i32
    %c1_i32 = arith.constant 1 : i32
    scf.for %arg4 = %c0_i32 to %1 step %c1_i32  : i32 {
      %c1_i32_2 = arith.constant 1 : i32
      %2 = arith.muli %arg4, %c1_i32_2 : i32
      %c0_i32_3 = arith.constant 0 : i32
      %3 = arith.addi %c0_i32_3, %2 : i32
      %4 = arith.addi %0, %3 : i32
      %5 = arith.index_cast %4 : i32 to index
      %6 = memref.load %arg1[%5] : memref<32xi32, #tpu.memory_space<smem>>
      %7 = arith.index_cast %6 : i32 to index
      %c0 = arith.constant 0 : index
      %8 = vector.load %arg2[%7, %c0] : memref<256x128xf32, #tpu.memory_space<vmem>>, vector<1x128xf32>
      %9 = arith.index_cast %3 : i32 to index
      %c0_4 = arith.constant 0 : index
      %10 = vector.load %arg3[%9, %c0_4] : memref<16x128xf32, #tpu.memory_space<vmem>>, vector<1x128xf32>
      tpu.vector_store %arg3[%9, %c0_4], %8 {strides = array<i32>} : memref<16x128xf32, #tpu.memory_space<vmem>>, vector<1x128xf32>,
    }
    %c16_i32_1 = arith.constant 16 : i32
    return
  }
  func.func @transform_0(%arg0: i32, %arg1: memref<32xi32, #tpu.memory_space<smem>>) -> (i32, i32) {
    %c0_i32 = arith.constant 0 : i32
    %c0_i32_0 = arith.constant 0 : i32
    %c0_i32_1 = arith.constant 0 : i32
    return %c0_i32, %c0_i32_0 : i32, i32
  }
  func.func @transform_1(%arg0: i32, %arg1: memref<32xi32, #tpu.memory_space<smem>>) -> (i32, i32) {
    %c0_i32 = arith.constant 0 : i32
    %c0_i32_0 = arith.constant 0 : i32
    return %arg0, %c0_i32 : i32, i32
  }
}

</mosaic_0001>

<llo_original>
// kernel: tpu_custom_call.1
$region0: #{tpu_custom_call.1}
  #allocation0 [shape = 'u32[]', space=smem, size = 0x4, offset = 0x4, fixed_abs, tag = 'smem constant byte address 0x4 - core index']
  #allocation1 [shape = 'u32[144,128]{1,0:T(1,128)}', space=vmem, size = 0x12000, scoped, tag = 'internal scratch']
  #allocation2 [shape = 's32[1]{0}', space=sflag, size = 0x4, scoped, tag = 'scoped memory for tpu_custom_call.1']
  #allocation3 [shape = 'u8[512]{0}', space=smem, size = 0x200, scoped, tag = 'prefetched SMEM operand 0']
  %s0 = inlined_call_operand.hbm [shape: s32[32], index: 0, kind: input, shape index: {}]
  %s1 = inlined_call_operand.hbm [shape: f32[256,128], index: 1, kind: input, shape index: {}]
  %s2 = inlined_call_operand.hbm [shape: f32[32,128], index: 2, kind: output, shape index: {}]
  %s3 = sld [smem:[#allocation0]]
  $region48: #{tpu_custom_call.1} parent=0
    _
  %s5 = ssub.s32 1, %s3
  %s6 = scalar_select 0, %s5, %s3
  %8 = dma.hbm_to_smem %s0, 16, [#allocation3], [#allocation2]
  %9 = dma.done [#allocation2], 16
  %10 = sfence
  $region1: #{tpu_custom_call.1} parent=0
    #allocation4 [shape = 'u8[131072]{0}', space=vmem, size = 0x20000, scoped, tag = 'input window, operand 1, single buffered']
    #allocation5 [shape = 's32[2]{0}', space=sflag, size = 0x8, scoped, tag = 'scoped memory for tpu_custom_call.1']
    #allocation6 [shape = 's32[2]{0}', space=sflag, size = 0x8, scoped, tag = 'scoped memory for tpu_custom_call.1']
    #allocation7 [shape = 'u8[16384]{0}', space=vmem, size = 0x4000, scoped, tag = 'output window, operand 0']
    %11 = vsyncpa [#allocation5], 0
    %12 = vsyncpa [#allocation6], 0
    %s13 = scalar_lea.sflag [#allocation6], 1
    %14 = vsyncpa %s13, 0
    loop: start=0, step=1, limit=4
    $region2: #{tpu_custom_call.1} parent=1 // loop_pre_header
      _
    $region3: #{tpu_custom_call.1} parent=1 // loop_header
      %s16 = sphi 0, %s20
      %p17 = scmp.ge.s32.totalorder %s16, 4
      %s24 = sphi 0, %s24
      %s26 = sphi 0, %s24
      %s27 = sphi 0, %s26
      %s41 = sphi 0, %s27
      %s47 = sphi 0, %s49
      %s50 = sphi 0, %s47
      %s51 = sphi 0, %s50
      %s67 = sphi 0, %s51
    $region4: #{tpu_custom_call.1} parent=1 // loop_header_branch
      %19 = sbr.rel (%p17) target = $region8
    $region5: #{tpu_custom_call.1} parent=1 // loop_body
      %s21 = ssub.s32 %s16, 1
      %s22 = ssub.s32 %s16, 2
      %s23 = sadd.s32 %s16, 1
      %s25 = sadd.s32 %s24, 1
      %p28 = scmp.eq.s32.totalorder %s16, 1
      %p29 = scmp.ne.s32.totalorder %s24, %s26
      %p30 = scmp.eq.s32.totalorder %s16, 0
      %p31 = por %p29, %p30
      %p32 = scmp.ne.s32.totalorder %s24, %s26
      %p33 = scmp.eq.s32.totalorder %s21, 1
      %p34 = por %p32, %p33
      %p35 = scmp.ne.s32.totalorder %s26, %s27
      %p36 = scmp.eq.s32.totalorder %s21, 0
      %p37 = por %p35, %p36
      %p38 = scmp.ne.s32.totalorder %s26, %s27
      %p39 = scmp.eq.s32.totalorder %s22, 1
      %p40 = por %p38, %p39
      %p42 = scmp.ne.s32.totalorder %s27, %s41
      %p43 = scmp.eq.s32.totalorder %s22, 0
      %p44 = por %p42, %p43
      %s45 = ssub.s32 %s16, %s23
      %p46 = scmp.eq.s32.totalorder %s45, 0
      %s48 = sadd.s32 %s47, 1
      %s49 = scalar_select %p46, %s47, %s48
      %p52 = pneg %p46
      %p53 = scmp.eq.s32.totalorder %s16, 1
      %p54 = por %p52, %p53
      %p55 = scmp.ne.s32.totalorder %s47, %s50
      %p56 = scmp.eq.s32.totalorder %s16, 0
      %p57 = por %p55, %p56
      %p58 = scmp.ne.s32.totalorder %s47, %s50
      %p59 = scmp.eq.s32.totalorder %s21, 1
      %p60 = por %p58, %p59
      %p61 = scmp.ne.s32.totalorder %s50, %s51
      %p62 = scmp.eq.s32.totalorder %s21, 0
      %p63 = por %p61, %p62
      %p64 = scmp.ne.s32.totalorder %s50, %s51
      %p65 = scmp.eq.s32.totalorder %s22, 1
      %p66 = por %p64, %p65
      %p68 = scmp.ne.s32.totalorder %s51, %s67
      %p69 = scmp.eq.s32.totalorder %s22, 0
      %p70 = por %p68, %p69
      %p71 = scmp.le.s32.totalorder 1, %s16
      %p72 = scmp.lt.s32.totalorder %s16, 3
      %p73 = pnand %p71, %p72
      %p74 = pneg %p73
      // Predicated region
      $region9: #{tpu_custom_call.1} parent=5 // pred_check
        _
      $region10: #{tpu_custom_call.1} parent=5 // pred_check_branch
        %76 = sbr.rel (%p73) target = $region12
      $region11: #{tpu_custom_call.1} parent=5 // pred_region
        %s77 = ssub.s32 %s16, 1
        // Predicated region
        $region13: #{tpu_custom_call.1} parent=11 // pred_check
          %p78 = pneg %p37
        $region14: #{tpu_custom_call.1} parent=11 // pred_check_branch
          %80 = sbr.rel (%p78) target = $region16
        $region15: #{tpu_custom_call.1} parent=11 // pred_region
          %s82 = ssub.s32 4096, 4096
          %83 = vsyncadd [#allocation5], %s82
          %s84 = sshll.u32 [#allocation4], 4
          %s85 = int_to_ptr.vmem [resolvable:$true] %s84
          %90 = dma.hbm_to_vmem [thread:$0]  %s1, 4096, %s85, [#allocation5], 128, 128, 8
        $region16: #{tpu_custom_call.1} parent=11 // pred_fallthru
          _
      $region12: #{tpu_custom_call.1} parent=5 // pred_fallthru
        _
      %p91 = scmp.lt.s32.totalorder %s16, 2
      // Predicated region
      $region17: #{tpu_custom_call.1} parent=5 // pred_check
        %p92 = pneg %p91
      $region18: #{tpu_custom_call.1} parent=5 // pred_check_branch
        %94 = sbr.rel (%p92) target = $region20
      $region19: #{tpu_custom_call.1} parent=5 // pred_region
        _
      $region20: #{tpu_custom_call.1} parent=5 // pred_fallthru
        _
      %p95 = scmp.le.s32.totalorder 1, %s16
      %p96 = scmp.lt.s32.totalorder %s16, 3
      %p97 = pnand %p95, %p96
      %p98 = pneg %p97
      // Predicated region
      $region21: #{tpu_custom_call.1} parent=5 // pred_check
        _
      $region22: #{tpu_custom_call.1} parent=5 // pred_check_branch
        %100 = sbr.rel (%p97) target = $region24
      $region23: #{tpu_custom_call.1} parent=5 // pred_region
        %s101 = ssub.s32 %s16, 1
        // Predicated region
        $region25: #{tpu_custom_call.1} parent=23 // pred_check
          %p102 = pneg %p37
        $region26: #{tpu_custom_call.1} parent=23 // pred_check_branch
          %104 = sbr.rel (%p102) target = $region28
        $region27: #{tpu_custom_call.1} parent=23 // pred_region
          %105 = dma.done [#allocation5], 4096
        $region28: #{tpu_custom_call.1} parent=23 // pred_fallthru
          _
        %p106 = pneg %p37
        %p107 = pneg %p34
        %p108 = pneg %p63
        %p109 = pneg %p60
        %s110 = sand.u32 %s50, 1
        %s111 = scalar_lea.sflag [#allocation6], %s110
        %s112 = sand.u32 %s50, 1
        %s113 = smul.addr %s112, 16
        %s114 = scalar_lea.vmem [#allocation7], %s113
        %s115 = smul.u32 2, %s21
        %s116 = smul.u32 %s21, 16
        loop: start=0, step=1, limit=16
        $region29: #{tpu_custom_call.1} parent=23 // loop_pre_header
          _
        $region30: #{tpu_custom_call.1} parent=23 // loop_header
          %s118 = sphi 0, %s122
          %p119 = scmp.ge.s32.totalorder %s118, 16
        $region31: #{tpu_custom_call.1} parent=23 // loop_header_branch
          %121 = sbr.rel (%p119) target = $region35
        $region32: #{tpu_custom_call.1} parent=23 // loop_body
          %s123 = sadd.s32 %s116, %s118
          %s124 = sld [smem:[#allocation3 + %s123]]
          %s125 = scalar_lea.vmem [#allocation4], %s124
          %v126 = vld [vmem:[%s125] sm:$0x1]
          %s127 = scalar_lea.vmem %s114, %s118 [#allocation7]
          %128 = vst [vmem:[%s127] sm:$0x1] %v126
        $region33: #{tpu_custom_call.1} parent=23 // loop_footer
          %s122 = sadd.s32 1, %s118
        $region34: #{tpu_custom_call.1} parent=23 // loop_footer_branch
          %117 = sbr.rel target = $region30
        $region35: #{tpu_custom_call.1} parent=23 // loop_exit
          _
        %s129 = sand.u32 %s50, 1
        %s130 = scalar_lea.sflag [#allocation6], %s129
        %s131 = sand.u32 %s50, 1
        %s132 = smul.addr %s131, 16
        %s133 = scalar_lea.vmem [#allocation7], %s132
        // Predicated region
        $region36: #{tpu_custom_call.1} parent=23 // pred_check
          %p134 = pneg %p60
        $region37: #{tpu_custom_call.1} parent=23 // pred_check_branch
          %136 = sbr.rel (%p134) target = $region39
        $region38: #{tpu_custom_call.1} parent=23 // pred_region
          %s137 = smul.u32 2, %s21
          %s139 = ssub.s32 256, 256
          %140 = vsyncadd %s130, %s139
          %s141 = smul.addr %s137, 128
          %s142 = scalar_lea.hbm %s2, %s141
          %s143 = sshll.u32 %s133, 4
          %s144 = int_to_ptr.vmem [resolvable:$true] %s143
          %149 = dma.vmem_to_hbm [thread:$0]  %s144, 256, %s142, %s130, 128, 128, 8
        $region39: #{tpu_custom_call.1} parent=23 // pred_fallthru
          _
      $region24: #{tpu_custom_call.1} parent=5 // pred_fallthru
        _
      %p150 = scmp.le.s32.totalorder 2, %s16
      // Predicated region
      $region40: #{tpu_custom_call.1} parent=5 // pred_check
        %p151 = pneg %p150
      $region41: #{tpu_custom_call.1} parent=5 // pred_check_branch
        %153 = sbr.rel (%p151) target = $region43
      $region42: #{tpu_custom_call.1} parent=5 // pred_region
        %s154 = ssub.s32 %s16, 2
        // Predicated region
        $region44: #{tpu_custom_call.1} parent=42 // pred_check
          %p155 = pneg %p66
        $region45: #{tpu_custom_call.1} parent=42 // pred_check_branch
          %157 = sbr.rel (%p155) target = $region47
        $region46: #{tpu_custom_call.1} parent=42 // pred_region
          %s158 = sand.u32 %s51, 1
          %s159 = scalar_lea.sflag [#allocation6], %s158
          %s160 = sand.u32 %s51, 1
          %s161 = smul.addr %s160, 16
          %s162 = scalar_lea.vmem [#allocation7], %s161
          %163 = dma.done %s159, 256
        $region47: #{tpu_custom_call.1} parent=42 // pred_fallthru
          _
      $region43: #{tpu_custom_call.1} parent=5 // pred_fallthru
        _
    $region6: #{tpu_custom_call.1} parent=1 // loop_footer
      %s20 = sadd.s32 1, %s16
    $region7: #{tpu_custom_call.1} parent=1 // loop_footer_branch
      %15 = sbr.rel target = $region3
    $region8: #{tpu_custom_call.1} parent=1 // loop_exit
      _
    %164 = vsyncpa [#allocation5], 1
    %s165 = scalar_lea.sflag [#allocation5], 1
    %166 = vsyncpa %s165, 1
    %167 = vsyncpa [#allocation6], 1
    %s168 = scalar_lea.sflag [#allocation6], 1
    %169 = vsyncpa %s168, 1

</llo_original>
